<compile_context>
chip_gen: v7x
topology: tpu7x:2x2x1
jax: 0.10.0
libtpu: 0.0.40
codegen_flags: <defaults>
</compile_context>

<pallas_src>
import functools

import jax
import jax.numpy as jnp
from jax.experimental import pallas as pl
from jax.experimental.pallas import tpu as pltpu


def _ce_kernel(pred_ref, true_ref, out_ref, *, hw, tile):
    """One (C, tile) slab of logits/labels -> (1, 128) partial-sum block."""
    j = pl.program_id(1)

    p = pred_ref[...].astype(jnp.float32)   # (C, T) logits, f32 for exp / lse
    t = true_ref[...]                       # (C, T) labels, native dtype
    c, tl = p.shape

    # log-sum-exp over the class (sublane) axis, numerically stable
    pmax = jnp.max(p, axis=0, keepdims=True)                                   # (1, T)
    lse = jnp.log(jnp.sum(jnp.exp(p - pmax), axis=0, keepdims=True)) + pmax    # (1, T)

    # target class = first argmax over C of y_true (torch tie-breaking):
    # one materialized cls iota, reused; masked_cls reused for the pick compare.
    # TODO(synk): for tiny C (e.g. 4) the sublane axis is only C/8 utilized; a
    # (k*C, tile/k) repack would help on v7x where this kernel is compute-bound.
    cls = jax.lax.broadcasted_iota(jnp.int32, (c, tl), 0)
    tmax = jnp.max(t, axis=0, keepdims=True)                                   # (1, T)
    masked_cls = jnp.where(t == tmax, cls, c)                                  # (C, T)
    idx = jnp.min(masked_cls, axis=0, keepdims=True)                           # (1, T)
    picked = jnp.sum(jnp.where(masked_cls == idx, p, 0.0),
                     axis=0, keepdims=True)                                    # (1, T)

    loss = lse - picked                                                        # (1, T)

    # mask lanes past the end of H*W (the ragged last tile loads garbage)
    lane = j * tile + jax.lax.broadcasted_iota(jnp.int32, (1, tl), 1)
    loss = jnp.where(lane < hw, loss, 0.0)

    if tl % 128 == 0:
        # lane-chunk reduction with independent accumulators (ILP) + short tree
        nchunks = tl // 128
        nacc = min(8, nchunks)
        accs = [loss[:, a * 128:(a + 1) * 128] for a in range(nacc)]
        for k in range(nacc, nchunks):
            accs[k % nacc] = accs[k % nacc] + loss[:, k * 128:(k + 1) * 128]
        while len(accs) > 1:
            nxt = [accs[i] + accs[i + 1] for i in range(0, len(accs) - 1, 2)]
            if len(accs) % 2:
                nxt.append(accs[-1])
            accs = nxt
        out_ref[...] = accs[0]                                                 # (1, 128)
    else:
        # small / odd-HW fallback (hw < 128): lane reduce, scalar in lane 0
        lane128 = jax.lax.broadcasted_iota(jnp.int32, (1, 128), 1)
        s = jnp.sum(loss, axis=1, keepdims=True)                               # (1, 1)
        out_ref[...] = jnp.where(lane128 == 0, s, jnp.float32(0.0))


def ce_loss(y_pred, y_true, *, tile_hw=32768):
    """Pallas implementation of CeLoss.forward (reduction='mean', weight=None)."""
    assert y_pred.shape == y_true.shape
    n, c = y_pred.shape[0], y_pred.shape[1]
    hw = 1
    for d in y_pred.shape[2:]:
        hw *= d

    # free reshapes only (no transpose / pad / dtype cast in the wrapper);
    # feed bf16 inputs at the call site on v5e/v6e to halve HBM traffic.
    p = y_pred.reshape(n, c, hw)
    t = y_true.reshape(n, c, hw)

    # Tile budget: 2 inputs x 2 pipeline buffers + an estimate of in-kernel f32
    # temporaries (~6 live (C,T) f32 slabs). Conservative enough for every
    # generation; vmem_limit_bytes is set explicitly below (48 MiB < v7x's
    # 64 MiB physical, comfortable on v5e/v6e's 128 MiB).
    # TODO(synk): vocab-scale C would need a C-tiled grid axis with an online
    # logsumexp / running argmax; not needed for segmentation-style class counts.
    itemsize = max(p.dtype.itemsize, t.dtype.itemsize)
    bytes_per_lane = 2 * 2 * c * itemsize + 6 * c * 4
    vmem_budget = 24 * 1024 * 1024
    max_tile = max(128, (vmem_budget // bytes_per_lane) // 128 * 128)
    cap = max(128, (tile_hw // 128) * 128)
    tile = min(cap, max_tile)

    if hw > tile:
        num_tiles = pl.cdiv(hw, tile)          # ragged last tile -> lane mask
    elif hw >= 256:
        # never emit a 1-step HW axis: split so both v7x TensorCores get work
        tile = max(128, ((pl.cdiv(hw, 2) + 127) // 128) * 128)
        num_tiles = pl.cdiv(hw, tile)
    elif hw > 128:
        tile = 128
        num_tiles = pl.cdiv(hw, tile)
    else:
        tile = hw                              # full-extent block (legal)
        num_tiles = 1

    partials = pl.pallas_call(
        functools.partial(_ce_kernel, hw=hw, tile=tile),
        out_shape=jax.ShapeDtypeStruct((n, num_tiles, 1, 128), jnp.float32),
        grid_spec=pltpu.PrefetchScalarGridSpec(
            num_scalar_prefetch=0,
            grid=(n, num_tiles),
            in_specs=[
                pl.BlockSpec((None, c, tile), lambda i, j: (i, 0, j)),
                pl.BlockSpec((None, c, tile), lambda i, j: (i, 0, j)),
            ],
            out_specs=pl.BlockSpec((None, None, 1, 128),
                                   lambda i, j: (i, j, 0, 0)),
        ),
        compiler_params=pltpu.CompilerParams(
            dimension_semantics=("parallel", "parallel"),
            vmem_limit_bytes=48 * 1024 * 1024),
    )(p, t)

    # mean reduction (CrossEntropyLoss default); tiny final reduce stays in JAX.
    # For extremely large N*H*W consider a pairwise wrapper-side sum.
    m = n * hw
    return jnp.sum(partials) / jnp.float32(m)


if __name__ == "__main__":
    # CeLoss has no learnable parameters (weights=None default).
    key = jax.random.PRNGKey(0)
    k1, k2 = jax.random.split(key)

    N, C, H, W = 2, 4, 16, 16
    y_pred = jax.random.normal(k1, (N, C, H, W), dtype=jnp.float32)
    y_true = jax.random.uniform(k2, (N, C, H, W), dtype=jnp.float32)  # argmax over C -> target

    loss = ce_loss(y_pred, y_true)
    jax.block_until_ready(loss)

    # plain-JAX reference mirroring torch.nn.CrossEntropyLoss semantics
    logits = y_pred.reshape(N, C, -1)
    target = jnp.argmax(y_true.reshape(N, C, -1), axis=1)
    logp = jax.nn.log_softmax(logits, axis=1)
    ref = -jnp.mean(jnp.take_along_axis(logp, target[:, None, :], axis=1))
    assert jnp.allclose(loss, ref, atol=1e-5, rtol=1e-5), (loss, ref)

    print("KERNEL_OK")
</pallas_src>

<mosaic_0001>
module attributes {stable_mosaic.version = 11 : i64} {
  func.func @_ce_kernel(%arg0: i32, %arg1: i32, %arg2: memref<1x4x128xf32, #tpu.memory_space<vmem>>, %arg3: memref<1x4x128xf32, #tpu.memory_space<vmem>>, %arg4: memref<1x1x1x128xf32, #tpu.memory_space<vmem>>) attributes {dimension_semantics = [#tpu.dimension_semantics<parallel>, #tpu.dimension_semantics<parallel>], iteration_bounds = array<i64: 2, 2>, scalar_prefetch = 0 : i64, scratch_operands = 0 : i64, tpu.core_type = #tpu.core_type<tc>, window_params = [{transform_indices = @transform_0, window_bounds = array<i64: 1, 4, 128>}, {transform_indices = @transform_1, window_bounds = array<i64: 1, 4, 128>}, {transform_indices = @transform_2, window_bounds = array<i64: 1, 1, 1, 128>}]} {
    %c0 = arith.constant 0 : index
    %c0_0 = arith.constant 0 : index
    %c0_1 = arith.constant 0 : index
    %0 = vector.load %arg2[%c0, %c0_0, %c0_1] : memref<1x4x128xf32, #tpu.memory_space<vmem>>, vector<1x4x128xf32>
    %1 = vector.shape_cast %0 : vector<1x4x128xf32> to vector<4x128xf32>
    %c0_2 = arith.constant 0 : index
    %c0_3 = arith.constant 0 : index
    %c0_4 = arith.constant 0 : index
    %2 = vector.load %arg3[%c0_2, %c0_3, %c0_4] : memref<1x4x128xf32, #tpu.memory_space<vmem>>, vector<1x4x128xf32>
    %3 = vector.shape_cast %2 : vector<1x4x128xf32> to vector<4x128xf32>
    %cst = arith.constant dense<0xFF800000> : vector<128xf32>
    %4 = vector.multi_reduction <maximumf>, %1, %cst [0] : vector<4x128xf32> to vector<128xf32>
    %5 = vector.shape_cast %4 : vector<128xf32> to vector<1x128xf32>
    %6 = vector.broadcast %5 : vector<1x128xf32> to vector<4x128xf32>
    %7 = arith.subf %1, %6 : vector<4x128xf32>
    %8 = math.exp %7 : vector<4x128xf32>
    %cst_5 = arith.constant dense<0.000000e+00> : vector<128xf32>
    %9 = vector.multi_reduction <add>, %8, %cst_5 [0] : vector<4x128xf32> to vector<128xf32>
    %10 = vector.shape_cast %9 : vector<128xf32> to vector<1x128xf32>
    %11 = math.log %10 : vector<1x128xf32>
    %12 = arith.addf %11, %5 : vector<1x128xf32>
    %13 = tpu.iota {dimensions = array<i32: 0>} : vector<4x128xi32>
    %cst_6 = arith.constant dense<0xFF800000> : vector<128xf32>
    %14 = vector.multi_reduction <maximumf>, %3, %cst_6 [0] : vector<4x128xf32> to vector<128xf32>
    %15 = vector.shape_cast %14 : vector<128xf32> to vector<1x128xf32>
    %16 = vector.broadcast %15 : vector<1x128xf32> to vector<4x128xf32>
    %17 = arith.cmpf oeq, %3, %16 : vector<4x128xf32>
    %c4_i32 = arith.constant 4 : i32
    %18 = vector.broadcast %c4_i32 : i32 to vector<4x128xi32>
    %19 = arith.select %17, %13, %18 : vector<4x128xi1>, vector<4x128xi32>
    %cst_7 = arith.constant dense<2147483647> : vector<128xi32>
    %20 = vector.multi_reduction <minsi>, %19, %cst_7 [0] : vector<4x128xi32> to vector<128xi32>
    %21 = vector.shape_cast %20 : vector<128xi32> to vector<1x128xi32>
    %22 = vector.broadcast %21 : vector<1x128xi32> to vector<4x128xi32>
    %23 = arith.cmpi eq, %19, %22 : vector<4x128xi32>
    %cst_8 = arith.constant 0.000000e+00 : f32
    %24 = vector.broadcast %cst_8 : f32 to vector<4x128xf32>
    %25 = arith.select %23, %1, %24 : vector<4x128xi1>, vector<4x128xf32>
    %cst_9 = arith.constant dense<0.000000e+00> : vector<128xf32>
    %26 = vector.multi_reduction <add>, %25, %cst_9 [0] : vector<4x128xf32> to vector<128xf32>
    %27 = vector.shape_cast %26 : vector<128xf32> to vector<1x128xf32>
    %28 = arith.subf %12, %27 : vector<1x128xf32>
    %c128_i32 = arith.constant 128 : i32
    %29 = arith.muli %arg1, %c128_i32 : i32
    %30 = tpu.iota {dimensions = array<i32: 1>} : vector<1x128xi32>
    %31 = vector.broadcast %29 : i32 to vector<1x128xi32>
    %32 = arith.addi %31, %30 : vector<1x128xi32>
    %c256_i32 = arith.constant 256 : i32
    %33 = vector.broadcast %c256_i32 : i32 to vector<1x128xi32>
    %34 = arith.cmpi slt, %32, %33 : vector<1x128xi32>
    %cst_10 = arith.constant 0.000000e+00 : f32
    %35 = vector.broadcast %cst_10 : f32 to vector<1x128xf32>
    %36 = arith.select %34, %28, %35 : vector<1x128xi1>, vector<1x128xf32>
    %c0_11 = arith.constant 0 : index
    %c0_12 = arith.constant 0 : index
    %c0_13 = arith.constant 0 : index
    %c0_14 = arith.constant 0 : index
    %37 = vector.load %arg4[%c0_11, %c0_12, %c0_13, %c0_14] : memref<1x1x1x128xf32, #tpu.memory_space<vmem>>, vector<1x1x1x128xf32>
    %38 = vector.shape_cast %37 : vector<1x1x1x128xf32> to vector<1x128xf32>
    %39 = vector.shape_cast %36 : vector<1x128xf32> to vector<1x1x1x128xf32>
    tpu.vector_store %arg4[%c0_11, %c0_12, %c0_13, %c0_14], %39 {strides = array<i32>} : memref<1x1x1x128xf32, #tpu.memory_space<vmem>>, vector<1x1x1x128xf32>,
    return
  }
  func.func @transform_0(%arg0: i32, %arg1: i32) -> (i32, i32, i32) {
    %c0_i32 = arith.constant 0 : i32
    %c0_i32_0 = arith.constant 0 : i32
    return %arg0, %c0_i32, %arg1 : i32, i32, i32
  }
  func.func @transform_1(%arg0: i32, %arg1: i32) -> (i32, i32, i32) {
    %c0_i32 = arith.constant 0 : i32
    %c0_i32_0 = arith.constant 0 : i32
    return %arg0, %c0_i32, %arg1 : i32, i32, i32
  }
  func.func @transform_2(%arg0: i32, %arg1: i32) -> (i32, i32, i32, i32) {
    %c0_i32 = arith.constant 0 : i32
    %c0_i32_0 = arith.constant 0 : i32
    %c0_i32_1 = arith.constant 0 : i32
    return %arg0, %arg1, %c0_i32, %c0_i32_0 : i32, i32, i32, i32
  }
}

</mosaic_0001>

<llo_original>
// kernel: tpu_custom_call.1
$region0: #{tpu_custom_call.1}
  #allocation0 [shape = 'u32[]', space=smem, size = 0x4, offset = 0x4, fixed_abs, tag = 'smem constant byte address 0x4 - core index']
  #allocation1 [shape = 'u32[144,128]{1,0:T(1,128)}', space=vmem, size = 0x12000, scoped, tag = 'internal scratch']
  %s0 = inlined_call_operand.hbm [shape: f32[2,4,256], index: 0, kind: input, shape index: {}]
  %s1 = inlined_call_operand.hbm [shape: f32[2,4,256], index: 1, kind: input, shape index: {}]
  %s2 = inlined_call_operand.hbm [shape: f32[2,2,1,128], index: 2, kind: output, shape index: {}]
  %s3 = sld [smem:[#allocation0]]
  $region49: #{tpu_custom_call.1} parent=0
    _
  %s5 = ssub.s32 1, %s3
  %s6 = scalar_select 0, %s5, %s3
  $region1: #{tpu_custom_call.1} parent=0
    #allocation2 [shape = 'u8[4096]{0}', space=vmem, size = 0x1000, scoped, tag = 'input window, operand 0']
    #allocation3 [shape = 's32[2]{0}', space=sflag, size = 0x8, scoped, tag = 'scoped memory for tpu_custom_call.1']
    #allocation4 [shape = 's32[2]{0}', space=sflag, size = 0x8, scoped, tag = 'scoped memory for tpu_custom_call.1']
    #allocation5 [shape = 'u8[4096]{0}', space=vmem, size = 0x1000, scoped, tag = 'input window, operand 1']
    #allocation6 [shape = 's32[2]{0}', space=sflag, size = 0x8, scoped, tag = 'scoped memory for tpu_custom_call.1']
    #allocation7 [shape = 'u8[1024]{0}', space=vmem, size = 0x400, scoped, tag = 'output window, operand 0']
    %7 = vsyncpa [#allocation3], 0
    %s8 = scalar_lea.sflag [#allocation3], 1
    %9 = vsyncpa %s8, 0
    %10 = vsyncpa [#allocation6], 0
    %s11 = scalar_lea.sflag [#allocation6], 1
    %12 = vsyncpa %s11, 0
    %13 = vsyncpa [#allocation4], 0
    %s14 = scalar_lea.sflag [#allocation4], 1
    %15 = vsyncpa %s14, 0
    loop: start=0, step=1, limit=6
    $region2: #{tpu_custom_call.1} parent=1 // loop_pre_header
      _
    $region3: #{tpu_custom_call.1} parent=1 // loop_header
      %s17 = sphi 0, %s21
      %p18 = scmp.ge.s32.totalorder %s17, 6
      %s24 = sphi 0, %s36
      %s25 = sphi 0, %s32
      %s26 = sphi 0, %s24
      %s27 = sphi 0, %s25
      %s28 = sphi 0, %s26
      %s29 = sphi 0, %s27
      %s41 = sphi 0, %s43
      %s44 = sphi 0, %s41
      %s45 = sphi 0, %s44
      %s61 = sphi 0, %s45
      %s69 = sphi 0, %s71
      %s72 = sphi 0, %s69
      %s73 = sphi 0, %s72
      %s89 = sphi 0, %s73
      %s97 = sphi 0, %s99
      %s100 = sphi 0, %s97
      %s101 = sphi 0, %s100
      %s117 = sphi 0, %s101
    $region4: #{tpu_custom_call.1} parent=1 // loop_header_branch
      %20 = sbr.rel (%p18) target = $region8
    $region5: #{tpu_custom_call.1} parent=1 // loop_body
      %s22 = ssub.s32 %s17, 1
      %s23 = ssub.s32 %s17, 2
      %s30 = sadd.s32 1, %s25
      %p31 = scmp.ge.s32.totalorder %s30, 2
      %s32 = scalar_select %p31, 0, %s30
      %s33 = sadd.s32 1, %s24
      %s34 = scalar_select %p31, %s33, %s24
      %p35 = scmp.ge.s32.totalorder %s34, 2
      %s36 = scalar_select %p35, 0, %s34
      %s37 = ssub.s32 %s24, %s36
      %s38 = ssub.s32 %s25, %s32
      %s39 = sor.u32 %s37, %s38
      %p40 = scmp.eq.s32.totalorder %s39, 0
      %s42 = sadd.s32 %s41, 1
      %s43 = scalar_select %p40, %s41, %s42
      %p46 = pneg %p40
      %p47 = scmp.eq.s32.totalorder %s17, 3
      %p48 = por %p46, %p47
      %p49 = scmp.ne.s32.totalorder %s41, %s44
      %p50 = scmp.eq.s32.totalorder %s17, 0
      %p51 = por %p49, %p50
      %p52 = scmp.ne.s32.totalorder %s41, %s44
      %p53 = scmp.eq.s32.totalorder %s22, 3
      %p54 = por %p52, %p53
      %p55 = scmp.ne.s32.totalorder %s44, %s45
      %p56 = scmp.eq.s32.totalorder %s22, 0
      %p57 = por %p55, %p56
      %p58 = scmp.ne.s32.totalorder %s44, %s45
      %p59 = scmp.eq.s32.totalorder %s23, 3
      %p60 = por %p58, %p59
      %p62 = scmp.ne.s32.totalorder %s45, %s61
      %p63 = scmp.eq.s32.totalorder %s23, 0
      %p64 = por %p62, %p63
      %s65 = ssub.s32 %s24, %s36
      %s66 = ssub.s32 %s25, %s32
      %s67 = sor.u32 %s65, %s66
      %p68 = scmp.eq.s32.totalorder %s67, 0
      %s70 = sadd.s32 %s69, 1
      %s71 = scalar_select %p68, %s69, %s70
      %p74 = pneg %p68
      %p75 = scmp.eq.s32.totalorder %s17, 3
      %p76 = por %p74, %p75
      %p77 = scmp.ne.s32.totalorder %s69, %s72
      %p78 = scmp.eq.s32.totalorder %s17, 0
      %p79 = por %p77, %p78
      %p80 = scmp.ne.s32.totalorder %s69, %s72
      %p81 = scmp.eq.s32.totalorder %s22, 3
      %p82 = por %p80, %p81
      %p83 = scmp.ne.s32.totalorder %s72, %s73
      %p84 = scmp.eq.s32.totalorder %s22, 0
      %p85 = por %p83, %p84
      %p86 = scmp.ne.s32.totalorder %s72, %s73
      %p87 = scmp.eq.s32.totalorder %s23, 3
      %p88 = por %p86, %p87
      %p90 = scmp.ne.s32.totalorder %s73, %s89
      %p91 = scmp.eq.s32.totalorder %s23, 0
      %p92 = por %p90, %p91
      %s93 = ssub.s32 %s24, %s36
      %s94 = ssub.s32 %s25, %s32
      %s95 = sor.u32 %s93, %s94
      %p96 = scmp.eq.s32.totalorder %s95, 0
      %s98 = sadd.s32 %s97, 1
      %s99 = scalar_select %p96, %s97, %s98
      %p102 = pneg %p96
      %p103 = scmp.eq.s32.totalorder %s17, 3
      %p104 = por %p102, %p103
      %p105 = scmp.ne.s32.totalorder %s97, %s100
      %p106 = scmp.eq.s32.totalorder %s17, 0
      %p107 = por %p105, %p106
      %p108 = scmp.ne.s32.totalorder %s97, %s100
      %p109 = scmp.eq.s32.totalorder %s22, 3
      %p110 = por %p108, %p109
      %p111 = scmp.ne.s32.totalorder %s100, %s101
      %p112 = scmp.eq.s32.totalorder %s22, 0
      %p113 = por %p111, %p112
      %p114 = scmp.ne.s32.totalorder %s100, %s101
      %p115 = scmp.eq.s32.totalorder %s23, 3
      %p116 = por %p114, %p115
      %p118 = scmp.ne.s32.totalorder %s101, %s117
      %p119 = scmp.eq.s32.totalorder %s23, 0
      %p120 = por %p118, %p119
      %p121 = scmp.le.s32.totalorder 1, %s17
      %p122 = scmp.lt.s32.totalorder %s17, 5
      %p123 = pnand %p121, %p122
      %p124 = pneg %p123
      // Predicated region
      $region9: #{tpu_custom_call.1} parent=5 // pred_check
        _
      $region10: #{tpu_custom_call.1} parent=5 // pred_check_branch
        %126 = sbr.rel (%p123) target = $region12
      $region11: #{tpu_custom_call.1} parent=5 // pred_region
        %s127 = ssub.s32 %s17, 1
      $region12: #{tpu_custom_call.1} parent=5 // pred_fallthru
        _
      %p128 = scmp.lt.s32.totalorder %s17, 4
      // Predicated region
      $region13: #{tpu_custom_call.1} parent=5 // pred_check
        %p129 = pneg %p128
      $region14: #{tpu_custom_call.1} parent=5 // pred_check_branch
        %131 = sbr.rel (%p129) target = $region16
      $region15: #{tpu_custom_call.1} parent=5 // pred_region
        // Predicated region
        $region17: #{tpu_custom_call.1} parent=15 // pred_check
          %p132 = pneg %p51
        $region18: #{tpu_custom_call.1} parent=15 // pred_check_branch
          %134 = sbr.rel (%p132) target = $region20
        $region19: #{tpu_custom_call.1} parent=15 // pred_region
          %s135 = sand.u32 %s41, 1
          %s136 = scalar_lea.sflag [#allocation3], %s135
          %s137 = sand.u32 %s41, 1
          %s138 = smul.addr %s137, 4
          %s139 = scalar_lea.vmem [#allocation2], %s138
          %s141 = ssub.s32 64, 64
          %142 = vsyncadd %s136, %s141
          %s143 = smul.addr %s24, 2
          %s144 = sadd.s32 %s25, %s143
          %s145 = smul.addr %s144, 64
          %s146 = scalar_lea.hbm %s0, %s145
          %s148 = sshll.u32 %s139, 4
          %s149 = int_to_ptr.vmem [resolvable:$true] %s148
          %151 = dma.hbm_to_vmem [thread:$0]  %s146, 64, %s149, %s136
        $region20: #{tpu_custom_call.1} parent=15 // pred_fallthru
          _
        // Predicated region
        $region21: #{tpu_custom_call.1} parent=15 // pred_check
          %p152 = pneg %p79
        $region22: #{tpu_custom_call.1} parent=15 // pred_check_branch
          %154 = sbr.rel (%p152) target = $region24
        $region23: #{tpu_custom_call.1} parent=15 // pred_region
          %s155 = sand.u32 %s69, 1
          %s156 = scalar_lea.sflag [#allocation6], %s155
          %s157 = sand.u32 %s69, 1
          %s158 = smul.addr %s157, 4
          %s159 = scalar_lea.vmem [#allocation5], %s158
          %s161 = ssub.s32 64, 64
          %162 = vsyncadd %s156, %s161
          %s163 = smul.addr %s24, 2
          %s164 = sadd.s32 %s25, %s163
          %s165 = smul.addr %s164, 64
          %s166 = scalar_lea.hbm %s1, %s165
          %s168 = sshll.u32 %s159, 4
          %s169 = int_to_ptr.vmem [resolvable:$true] %s168
          %171 = dma.hbm_to_vmem [thread:$0]  %s166, 64, %s169, %s156
        $region24: #{tpu_custom_call.1} parent=15 // pred_fallthru
          _
      $region16: #{tpu_custom_call.1} parent=5 // pred_fallthru
        _
      %p172 = scmp.le.s32.totalorder 1, %s17
      %p173 = scmp.lt.s32.totalorder %s17, 5
      %p174 = pnand %p172, %p173
      %p175 = pneg %p174
      // Predicated region
      $region25: #{tpu_custom_call.1} parent=5 // pred_check
        _
      $region26: #{tpu_custom_call.1} parent=5 // pred_check_branch
        %177 = sbr.rel (%p174) target = $region28
      $region27: #{tpu_custom_call.1} parent=5 // pred_region
        %s178 = ssub.s32 %s17, 1
        %s179 = sand.u32 %s44, 1
        %s180 = scalar_lea.sflag [#allocation3], %s179
        %s181 = sand.u32 %s44, 1
        %s182 = smul.addr %s181, 4
        %s183 = scalar_lea.vmem [#allocation2], %s182
        // Predicated region
        $region29: #{tpu_custom_call.1} parent=27 // pred_check
          %p184 = pneg %p57
        $region30: #{tpu_custom_call.1} parent=27 // pred_check_branch
          %186 = sbr.rel (%p184) target = $region32
        $region31: #{tpu_custom_call.1} parent=27 // pred_region
          %187 = dma.done %s180, 64
        $region32: #{tpu_custom_call.1} parent=27 // pred_fallthru
          _
        %s188 = sand.u32 %s72, 1
        %s189 = scalar_lea.sflag [#allocation6], %s188
        %s190 = sand.u32 %s72, 1
        %s191 = smul.addr %s190, 4
        %s192 = scalar_lea.vmem [#allocation5], %s191
        // Predicated region
        $region33: #{tpu_custom_call.1} parent=27 // pred_check
          %p193 = pneg %p85
        $region34: #{tpu_custom_call.1} parent=27 // pred_check_branch
          %195 = sbr.rel (%p193) target = $region36
        $region35: #{tpu_custom_call.1} parent=27 // pred_region
          %196 = dma.done %s189, 64
        $region36: #{tpu_custom_call.1} parent=27 // pred_fallthru
          _
        %s197 = sand.u32 %s44, 1
        %s198 = scalar_lea.sflag [#allocation3], %s197
        %s199 = sand.u32 %s44, 1
        %s200 = smul.addr %s199, 4
        %s201 = scalar_lea.vmem [#allocation2], %s200
        %p202 = pneg %p57
        %p203 = pneg %p54
        %s204 = sand.u32 %s72, 1
        %s205 = scalar_lea.sflag [#allocation6], %s204
        %s206 = sand.u32 %s72, 1
        %s207 = smul.addr %s206, 4
        %s208 = scalar_lea.vmem [#allocation5], %s207
        %p209 = pneg %p85
        %p210 = pneg %p82
        %p211 = pneg %p113
        %p212 = pneg %p110
        %s213 = sand.u32 %s100, 1
        %s214 = scalar_lea.sflag [#allocation4], %s213
        %s215 = sand.u32 %s100, 1
        %s216 = scalar_lea.vmem [#allocation7], %s215
        %v217 = vld [vmem:[%s183] sm:$0xf]
        %v218 = vld [vmem:[%s192] sm:$0xf]
        %vm219 = vcmask 1043456
        %v220 = vsel %vm219, %v217, -inf
        %v221 = vrot.slane %v220, 4
        %v222 = vmax.f32 %v220, %v221
        %v223 = vrot.slane %v222, 2
        %v224 = vmax.f32 %v222, %v223
        %v225 = vrot.slane %v224, 1
        %v226 = vmax.f32 %v224, %v225
        %v227 = vsub.f32 %v217, %v226
        %v228 = vmul.f32 %v227, 1.442695
        %v229 = vpow.pop %v228
        %v230 = vsel %vm219, %v229, 0.0
        %v231 = vrot.slane %v230, 4
        %v232 = vadd.f32 %v230, %v231
        %v233 = vrot.slane %v232, 2
        %v234 = vadd.f32 %v232, %v233
        %v235 = vrot.slane %v234, 1
        %v236 = vadd.f32 %v234, %v235
        %v237 = vlog2.pop %v236
        %v238 = vmul.f32 %v237, 0.6931472
        %v239 = vadd.f32 %v238, %v226
        %v240 = vlaneseq
        %v241 = vshrl.u32 %v240, 7
        %v242 = vsel %vm219, %v218, -inf
        %v243 = vrot.slane %v242, 4
        %v244 = vmax.f32 %v242, %v243
        %v245 = vrot.slane %v244, 2
        %v246 = vmax.f32 %v244, %v245
        %v247 = vrot.slane %v246, 1
        %v248 = vmax.f32 %v246, %v247
        %vm249 = vcmp.eq.f32.partialorder %v218, %v248
        %v250 = vsel %vm249, %v241, 4
        %v251 = vsel %vm219, %v250, 2147483647
        %v252 = vrot.slane %v251, 4
        %vm253 = vcmp.lt.s32.totalorder %v251, %v252
        %v254 = vsel %vm253, %v251, %v252
        %v255 = vrot.slane %v254, 2
        %vm256 = vcmp.lt.s32.totalorder %v254, %v255
        %v257 = vsel %vm256, %v254, %v255
        %v258 = vrot.slane %v257, 1
        %vm259 = vcmp.lt.s32.totalorder %v257, %v258
        %v260 = vsel %vm259, %v257, %v258
        %vm261 = vcmp.eq.s32.totalorder %v250, %v260
        %v262 = vsel %vm261, %v217, 0.0
        %v263 = vsel %vm219, %v262, 0.0
        %v264 = vrot.slane %v263, 4
        %v265 = vadd.f32 %v263, %v264
        %v266 = vrot.slane %v265, 2
        %v267 = vadd.f32 %v265, %v266
        %v268 = vrot.slane %v267, 1
        %v269 = vadd.f32 %v267, %v268
        %v270 = vsub.f32 %v239, %v269
        %s271 = smul.u32 %s27, 128
        %v272 = vlaneseq
        %v273 = vand.u32 %v272, 127
        %v274 = vstv %s271
        %v275 = vadd.s32 %v274, %v273
        %vm276 = vcmp.lt.s32.totalorder %v275, 256
        %v277 = vsel %vm276, %v270, 0.0
        %278 = vst [vmem:[%s216] sm:$0x1] %v277
        %s279 = sand.u32 %s100, 1
        %s280 = scalar_lea.sflag [#allocation4], %s279
        %s281 = sand.u32 %s100, 1
        %s282 = scalar_lea.vmem [#allocation7], %s281
        // Predicated region
        $region37: #{tpu_custom_call.1} parent=27 // pred_check
          %p283 = pneg %p110
        $region38: #{tpu_custom_call.1} parent=27 // pred_check_branch
          %285 = sbr.rel (%p283) target = $region40
        $region39: #{tpu_custom_call.1} parent=27 // pred_region
          %s287 = ssub.s32 16, 16
          %288 = vsyncadd %s280, %s287
          %s289 = smul.addr %s26, 2
          %s290 = sadd.s32 %s27, %s289
          %s291 = smul.addr %s290, 16
          %s292 = scalar_lea.hbm %s2, %s291
          %s294 = sshll.u32 %s282, 4
          %s295 = int_to_ptr.vmem [resolvable:$true] %s294
          %297 = dma.vmem_to_hbm [thread:$0]  %s295, 16, %s292, %s280
        $region40: #{tpu_custom_call.1} parent=27 // pred_fallthru
          _
      $region28: #{tpu_custom_call.1} parent=5 // pred_fallthru
        _
      %p298 = scmp.le.s32.totalorder 2, %s17
      // Predicated region
      $region41: #{tpu_custom_call.1} parent=5 // pred_check
        %p299 = pneg %p298
      $region42: #{tpu_custom_call.1} parent=5 // pred_check_branch
        %301 = sbr.rel (%p299) target = $region44
      $region43: #{tpu_custom_call.1} parent=5 // pred_region
        %s302 = ssub.s32 %s17, 2
        // Predicated region
        $region45: #{tpu_custom_call.1} parent=43 // pred_check
          %p303 = pneg %p116
        $region46: #{tpu_custom_call.1} parent=43 // pred_check_branch
          %305 = sbr.rel (%p303) target = $region48
        $region47: #{tpu_custom_call.1} parent=43 // pred_region
          %s306 = sand.u32 %s101, 1
          %s307 = scalar_lea.sflag [#allocation4], %s306
          %s308 = sand.u32 %s101, 1
          %s309 = scalar_lea.vmem [#allocation7], %s308
          %310 = dma.done %s307, 16
        $region48: #{tpu_custom_call.1} parent=43 // pred_fallthru
          _
      $region44: #{tpu_custom_call.1} parent=5 // pred_fallthru
        _
    $region6: #{tpu_custom_call.1} parent=1 // loop_footer
      %s21 = sadd.s32 1, %s17
    $region7: #{tpu_custom_call.1} parent=1 // loop_footer_branch
      %16 = sbr.rel target = $region3
    $region8: #{tpu_custom_call.1} parent=1 // loop_exit
      _
    %311 = vsyncpa [#allocation3], 1
    %s312 = scalar_lea.sflag [#allocation3], 1
    %313 = vsyncpa %s312, 1
    %314 = vsyncpa [#allocation6], 1
    %s315 = scalar_lea.sflag [#allocation6], 1
    %316 = vsyncpa %s315, 1
    %317 = vsyncpa [#allocation4], 1
    %s318 = scalar_lea.sflag [#allocation4], 1
    %319 = vsyncpa %s318, 1

</llo_original>
